<compile_context>
chip_gen: v7x
topology: tpu7x:2x2x1
jax: 0.10.0
libtpu: 0.0.40
codegen_flags: <defaults>
</compile_context>

<pallas_src>
import functools

import jax
import jax.numpy as jnp
from jax import lax
from jax.experimental import pallas as pl
from jax.experimental.pallas import tpu as pltpu


def _round_up(x, m):
    return ((x + m - 1) // m) * m


def _frnn_kernel(center_ref, pos_ref, tri_ref, out_ref, count_ref, *,
                 radius_sq, n_points, n_neighbor, tn):
    """One (batch, S-tile, N-tile) grid step.

    center_ref: (1, tS, 8) f32  centroid xyz in lanes 0..2
    pos_ref:    (1, 8, tN) f32  point xyz in sublanes 0..2 (N on lanes)
    tri_ref:    (tN, tN)   f32  strictly lower-triangular(row<col) 0/1 matrix
    out_ref:    (1, tS, K) i32  neighbor indices (resident across N tiles)
    count_ref:  (tS, 1)    f32  running per-row in-radius count (scratch)
    """
    ni = pl.program_id(2)

    @pl.when(ni == 0)
    def _init():
        out_ref[...] = jnp.full_like(out_ref, n_points)
        count_ref[...] = jnp.zeros_like(count_ref)

    c = center_ref[0]              # (tS, 8)
    p = pos_ref[0]                 # (8, tN)

    # Direct-difference squared distances on the VPU (no cancellation).
    d = ((c[:, 0:1] - p[0:1, :]) ** 2
         + (c[:, 1:2] - p[1:2, :]) ** 2
         + (c[:, 2:3] - p[2:3, :]) ** 2)                       # (tS, tN)
    mask = d <= radius_sq
    maskf = mask.astype(jnp.float32)

    # Exclusive prefix count within this N tile (MXU), plus carried count
    # from previous tiles -> global rank of each in-radius point per row.
    prefix = jnp.dot(maskf, tri_ref[...],
                     preferred_element_type=jnp.float32)       # (tS, tN)
    rank = count_ref[...] + prefix                             # (tS, tN)

    gidx = (ni * tn + lax.broadcasted_iota(jnp.int32, mask.shape, 1)
            ).astype(jnp.float32)                              # global index

    ts = out_ref.shape[1]
    K = out_ref.shape[2]
    col = lax.broadcasted_iota(jnp.int32, (ts, K), 1)
    upd = jnp.zeros((ts, K), jnp.float32)
    for k in range(n_neighbor):
        # at most one element per row has (mask & rank == k); encode idx+1, 0=miss
        sel = mask & (rank == jnp.float32(k))
        enc = jnp.sum(jnp.where(sel, gidx + 1.0, 0.0), axis=-1, keepdims=True)
        upd = jnp.where(col == k, enc, upd)

    out_ref[0] = jnp.where(upd > 0.0, (upd - 1.0).astype(jnp.int32), out_ref[0])
    count_ref[...] = count_ref[...] + jnp.sum(maskf, axis=-1, keepdims=True)

    @pl.when(ni == pl.num_programs(2) - 1)
    def _finalize():
        cur = out_ref[0]                        # (tS, K)
        first = cur[:, 0:1]
        out_ref[0] = jnp.where(cur == n_points, first, cur)


def fixed_radius_near_neighbors(pos, centroids, *, radius, n_neighbor,
                                ts=None, tn=None):
    """pos: [B, N, 3] f32; centroids: [B, S] int -> [B, S, n_neighbor] int32."""
    B, N, _ = pos.shape
    S = centroids.shape[1]
    K = int(n_neighbor)

    if ts is None:
        ts = min(128, _round_up(S, 8))
    if tn is None:
        tn = min(512, _round_up(N, 128))
    S_pad = _round_up(S, ts)
    N_pad = _round_up(N, tn)

    # index_points(pos, centroids) — tiny gather glue in plain JAX.
    center_pos = jnp.take_along_axis(
        pos, centroids[..., None].astype(jnp.int32), axis=1)    # [B, S, 3]

    # Centers: [B, S_pad, 8]; padded rows get +1e9 coords (never within radius).
    centers = jnp.pad(center_pos, ((0, 0), (0, S_pad - S), (0, 5)),
                      constant_values=1e9)
    # Points: transpose so N is the lane axis -> [B, 8, N_pad]; padding = -1e9.
    pos_t = jnp.transpose(pos, (0, 2, 1))                        # [B, 3, N]
    points = jnp.pad(pos_t, ((0, 0), (0, 5), (0, N_pad - N)),
                     constant_values=-1e9)

    # Constant strictly-lower-triangular (row < col) matrix for the in-tile
    # exclusive prefix count: prefix[:, n] = sum_{m < n} mask[:, m].
    tri = (jnp.arange(tn)[:, None] < jnp.arange(tn)[None, :]).astype(jnp.float32)

    kernel = functools.partial(_frnn_kernel, radius_sq=float(radius) ** 2,
                               n_points=N, n_neighbor=K, tn=tn)

    grid = (B, S_pad // ts, N_pad // tn)
    flops = B * S_pad * N_pad * (8 + 2 * tn)
    bytes_accessed = (B * (S_pad // ts) * 8 * N_pad * 4      # points per S tile
                      + B * S_pad * 8 * 4                    # centers
                      + B * S_pad * K * 4                    # output
                      + 4 * tn * tn)                         # tri constant

    out = pl.pallas_call(
        kernel,
        out_shape=jax.ShapeDtypeStruct((B, S_pad, K), jnp.int32),
        grid_spec=pltpu.PrefetchScalarGridSpec(
            num_scalar_prefetch=0,
            grid=grid,
            in_specs=[
                pl.BlockSpec((1, ts, 8), lambda b, si, ni: (b, si, 0)),
                pl.BlockSpec((1, 8, tn), lambda b, si, ni: (b, 0, ni)),
                pl.BlockSpec((tn, tn), lambda b, si, ni: (0, 0)),
            ],
            out_specs=pl.BlockSpec((1, ts, K), lambda b, si, ni: (b, si, 0)),
            scratch_shapes=[pltpu.VMEM((ts, 1), jnp.float32)],
        ),
        compiler_params=pltpu.CompilerParams(
            dimension_semantics=("parallel", "parallel", "arbitrary"),
            vmem_limit_bytes=32 * 1024 * 1024,
        ),
        cost_estimate=pl.CostEstimate(flops=flops, transcendentals=0,
                                      bytes_accessed=bytes_accessed),
    )(centers, points, tri)

    return out[:, :S, :]


if __name__ == "__main__":
    key = jax.random.PRNGKey(0)
    k_pos, k_cent = jax.random.split(key)

    B, N, S = 2, 16, 8
    radius = 0.4
    n_neighbor = 4

    pos = jax.random.uniform(k_pos, (B, N, 3), dtype=jnp.float32)   # [0,1]^3
    centroids = jax.random.randint(k_cent, (B, S), 0, N, dtype=jnp.int32)

    out = fixed_radius_near_neighbors(pos, centroids, radius=radius,
                                      n_neighbor=n_neighbor)
    out = jax.block_until_ready(out)

    # Pure-JAX reference of the same dense semantics (sort-based, as in torch).
    center_pos = jnp.take_along_axis(pos, centroids[..., None], axis=1)
    d = jnp.sum((center_pos[:, :, None, :] - pos[:, None, :, :]) ** 2, axis=-1)
    ref_idx = jnp.where(d > radius ** 2, N, jnp.arange(N)[None, None, :])
    ref_idx = jnp.sort(ref_idx, axis=-1)[:, :, :n_neighbor]
    ref_first = ref_idx[:, :, 0:1]
    ref_idx = jnp.where(ref_idx == N, ref_first, ref_idx)

    assert out.shape == (B, S, n_neighbor), out.shape
    assert jnp.array_equal(out, ref_idx.astype(jnp.int32)), (out, ref_idx)

    print("KERNEL_OK")
</pallas_src>

<mosaic_0001>
module attributes {stable_mosaic.version = 11 : i64} {
  func.func @_frnn_kernel(%arg0: i32, %arg1: i32, %arg2: i32, %arg3: memref<1x8x8xf32, #tpu.memory_space<vmem>>, %arg4: memref<1x8x128xf32, #tpu.memory_space<vmem>>, %arg5: memref<128x128xf32, #tpu.memory_space<vmem>>, %arg6: memref<1x8x4xi32, #tpu.memory_space<vmem>>, %arg7: memref<8x1xf32, #tpu.memory_space<vmem>>) attributes {dimension_semantics = [#tpu.dimension_semantics<parallel>, #tpu.dimension_semantics<parallel>, #tpu.dimension_semantics<arbitrary>], iteration_bounds = array<i64: 2, 1, 1>, scalar_prefetch = 0 : i64, scratch_operands = 1 : i64, tpu.core_type = #tpu.core_type<tc>, window_params = [{transform_indices = @transform_0, window_bounds = array<i64: 1, 8, 8>}, {transform_indices = @transform_1, window_bounds = array<i64: 1, 8, 128>}, {pipeline_mode = #tpu.pipeline_mode<synchronous>, transform_indices = @transform_2, window_bounds = array<i64: 128, 128>}, {transform_indices = @transform_3, window_bounds = array<i64: 1, 8, 4>}]} {
    %c0_i32 = arith.constant 0 : i32
    %0 = arith.cmpi eq, %arg2, %c0_i32 : i32
    %1 = arith.extui %0 : i1 to i32
    %c0_i32_0 = arith.constant 0 : i32
    %2 = arith.cmpi ne, %1, %c0_i32_0 : i32
    scf.if %2 {
      %c16_i32 = arith.constant 16 : i32
      %118 = vector.broadcast %c16_i32 : i32 to vector<1x8x4xi32>
      %c0_44 = arith.constant 0 : index
      %c0_45 = arith.constant 0 : index
      %c0_46 = arith.constant 0 : index
      %119 = vector.load %arg6[%c0_44, %c0_45, %c0_46] : memref<1x8x4xi32, #tpu.memory_space<vmem>>, vector<1x8x4xi32>
      tpu.vector_store %arg6[%c0_44, %c0_45, %c0_46], %118 {strides = array<i32>} : memref<1x8x4xi32, #tpu.memory_space<vmem>>, vector<1x8x4xi32>,
      %cst_47 = arith.constant 0.000000e+00 : f32
      %120 = vector.broadcast %cst_47 : f32 to vector<8x1xf32>
      %c0_48 = arith.constant 0 : index
      %c0_49 = arith.constant 0 : index
      %121 = vector.load %arg7[%c0_48, %c0_49] : memref<8x1xf32, #tpu.memory_space<vmem>>, vector<8x1xf32>
      tpu.vector_store %arg7[%c0_48, %c0_49], %120 {strides = array<i32>} : memref<8x1xf32, #tpu.memory_space<vmem>>, vector<8x1xf32>,
    } else {
    }
    %c0 = arith.constant 0 : index
    %c0_1 = arith.constant 0 : index
    %c0_2 = arith.constant 0 : index
    %3 = vector.load %arg3[%c0, %c0_1, %c0_2] : memref<1x8x8xf32, #tpu.memory_space<vmem>>, vector<1x8x8xf32>
    %4 = vector.shape_cast %3 : vector<1x8x8xf32> to vector<8x8xf32>
    %c0_3 = arith.constant 0 : index
    %c0_4 = arith.constant 0 : index
    %c0_5 = arith.constant 0 : index
    %5 = vector.load %arg4[%c0_3, %c0_4, %c0_5] : memref<1x8x128xf32, #tpu.memory_space<vmem>>, vector<1x8x128xf32>
    %6 = vector.shape_cast %5 : vector<1x8x128xf32> to vector<8x128xf32>
    %7 = vector.extract_strided_slice %4 {offsets = [0, 0], sizes = [8, 1], strides = [1, 1]} : vector<8x8xf32> to vector<8x1xf32>
    %8 = vector.extract_strided_slice %6 {offsets = [0, 0], sizes = [1, 128], strides = [1, 1]} : vector<8x128xf32> to vector<1x128xf32>
    %9 = vector.broadcast %7 : vector<8x1xf32> to vector<8x128xf32>
    %10 = vector.broadcast %8 : vector<1x128xf32> to vector<8x128xf32>
    %11 = arith.subf %9, %10 : vector<8x128xf32>
    %12 = arith.mulf %11, %11 : vector<8x128xf32>
    %13 = vector.extract_strided_slice %4 {offsets = [0, 1], sizes = [8, 1], strides = [1, 1]} : vector<8x8xf32> to vector<8x1xf32>
    %14 = vector.extract_strided_slice %6 {offsets = [1, 0], sizes = [1, 128], strides = [1, 1]} : vector<8x128xf32> to vector<1x128xf32>
    %15 = vector.broadcast %13 : vector<8x1xf32> to vector<8x128xf32>
    %16 = vector.broadcast %14 : vector<1x128xf32> to vector<8x128xf32>
    %17 = arith.subf %15, %16 : vector<8x128xf32>
    %18 = arith.mulf %17, %17 : vector<8x128xf32>
    %19 = arith.addf %12, %18 : vector<8x128xf32>
    %20 = vector.extract_strided_slice %4 {offsets = [0, 2], sizes = [8, 1], strides = [1, 1]} : vector<8x8xf32> to vector<8x1xf32>
    %21 = vector.extract_strided_slice %6 {offsets = [2, 0], sizes = [1, 128], strides = [1, 1]} : vector<8x128xf32> to vector<1x128xf32>
    %22 = vector.broadcast %20 : vector<8x1xf32> to vector<8x128xf32>
    %23 = vector.broadcast %21 : vector<1x128xf32> to vector<8x128xf32>
    %24 = arith.subf %22, %23 : vector<8x128xf32>
    %25 = arith.mulf %24, %24 : vector<8x128xf32>
    %26 = arith.addf %19, %25 : vector<8x128xf32>
    %cst = arith.constant 1.600000e-01 : f32
    %27 = vector.broadcast %cst : f32 to vector<8x128xf32>
    %28 = arith.cmpf ole, %26, %27 : vector<8x128xf32>
    %29 = arith.extui %28 : vector<8x128xi1> to vector<8x128xi32>
    %30 = arith.sitofp %29 : vector<8x128xi32> to vector<8x128xf32>
    %c0_6 = arith.constant 0 : index
    %c0_7 = arith.constant 0 : index
    %31 = vector.load %arg5[%c0_6, %c0_7] : memref<128x128xf32, #tpu.memory_space<vmem>>, vector<128x128xf32>
    %cst_8 = arith.constant dense<0.000000e+00> : vector<8x128xf32>
    %32 = tpu.matmul %30, %31, %cst_8 {dimension_numbers = #tpu.dot_dimension_numbers<[1], [0], [0], [1], [0, 0, 1, 1], [], []>} : vector<8x128xf32>, vector<128x128xf32>, vector<8x128xf32> -> vector<8x128xf32>
    %c0_9 = arith.constant 0 : index
    %c0_10 = arith.constant 0 : index
    %33 = vector.load %arg7[%c0_9, %c0_10] : memref<8x1xf32, #tpu.memory_space<vmem>>, vector<8x1xf32>
    %34 = vector.broadcast %33 : vector<8x1xf32> to vector<8x128xf32>
    %35 = arith.addf %34, %32 : vector<8x128xf32>
    %c128_i32 = arith.constant 128 : i32
    %36 = arith.muli %arg2, %c128_i32 : i32
    %37 = tpu.iota {dimensions = array<i32: 1>} : vector<8x128xi32>
    %38 = vector.broadcast %36 : i32 to vector<8x128xi32>
    %39 = arith.addi %38, %37 : vector<8x128xi32>
    %40 = arith.sitofp %39 : vector<8x128xi32> to vector<8x128xf32>
    %41 = tpu.iota {dimensions = array<i32: 1>} : vector<8x4xi32>
    %cst_11 = arith.constant 0.000000e+00 : f32
    %42 = vector.broadcast %cst_11 : f32 to vector<8x4xf32>
    %cst_12 = arith.constant 0.000000e+00 : f32
    %43 = vector.broadcast %cst_12 : f32 to vector<8x128xf32>
    %44 = arith.cmpf oeq, %35, %43 : vector<8x128xf32>
    %45 = arith.andi %28, %44 : vector<8x128xi1>
    %cst_13 = arith.constant 1.000000e+00 : f32
    %46 = vector.broadcast %cst_13 : f32 to vector<8x128xf32>
    %47 = arith.addf %40, %46 : vector<8x128xf32>
    %cst_14 = arith.constant 0.000000e+00 : f32
    %48 = vector.broadcast %cst_14 : f32 to vector<8x128xf32>
    %49 = arith.select %45, %47, %48 : vector<8x128xi1>, vector<8x128xf32>
    %cst_15 = arith.constant dense<0.000000e+00> : vector<8xf32>
    %50 = vector.multi_reduction <add>, %49, %cst_15 [1] : vector<8x128xf32> to vector<8xf32>
    %51 = vector.shape_cast %50 : vector<8xf32> to vector<8x1xf32>
    %c0_i32_16 = arith.constant 0 : i32
    %52 = vector.broadcast %c0_i32_16 : i32 to vector<8x4xi32>
    %53 = arith.cmpi eq, %41, %52 : vector<8x4xi32>
    %54 = vector.shape_cast %51 : vector<8x1xf32> to vector<8x1xf32>
    %55 = vector.broadcast %54 : vector<8x1xf32> to vector<8x4xf32>
    %56 = arith.select %53, %55, %42 : vector<8x4xi1>, vector<8x4xf32>
    %cst_17 = arith.constant 1.000000e+00 : f32
    %57 = vector.broadcast %cst_17 : f32 to vector<8x128xf32>
    %58 = arith.cmpf oeq, %35, %57 : vector<8x128xf32>
    %59 = arith.andi %28, %58 : vector<8x128xi1>
    %cst_18 = arith.constant 1.000000e+00 : f32
    %60 = vector.broadcast %cst_18 : f32 to vector<8x128xf32>
    %61 = arith.addf %40, %60 : vector<8x128xf32>
    %cst_19 = arith.constant 0.000000e+00 : f32
    %62 = vector.broadcast %cst_19 : f32 to vector<8x128xf32>
    %63 = arith.select %59, %61, %62 : vector<8x128xi1>, vector<8x128xf32>
    %cst_20 = arith.constant dense<0.000000e+00> : vector<8xf32>
    %64 = vector.multi_reduction <add>, %63, %cst_20 [1] : vector<8x128xf32> to vector<8xf32>
    %65 = vector.shape_cast %64 : vector<8xf32> to vector<8x1xf32>
    %c1_i32 = arith.constant 1 : i32
    %66 = vector.broadcast %c1_i32 : i32 to vector<8x4xi32>
    %67 = arith.cmpi eq, %41, %66 : vector<8x4xi32>
    %68 = vector.shape_cast %65 : vector<8x1xf32> to vector<8x1xf32>
    %69 = vector.broadcast %68 : vector<8x1xf32> to vector<8x4xf32>
    %70 = arith.select %67, %69, %56 : vector<8x4xi1>, vector<8x4xf32>
    %cst_21 = arith.constant 2.000000e+00 : f32
    %71 = vector.broadcast %cst_21 : f32 to vector<8x128xf32>
    %72 = arith.cmpf oeq, %35, %71 : vector<8x128xf32>
    %73 = arith.andi %28, %72 : vector<8x128xi1>
    %cst_22 = arith.constant 1.000000e+00 : f32
    %74 = vector.broadcast %cst_22 : f32 to vector<8x128xf32>
    %75 = arith.addf %40, %74 : vector<8x128xf32>
    %cst_23 = arith.constant 0.000000e+00 : f32
    %76 = vector.broadcast %cst_23 : f32 to vector<8x128xf32>
    %77 = arith.select %73, %75, %76 : vector<8x128xi1>, vector<8x128xf32>
    %cst_24 = arith.constant dense<0.000000e+00> : vector<8xf32>
    %78 = vector.multi_reduction <add>, %77, %cst_24 [1] : vector<8x128xf32> to vector<8xf32>
    %79 = vector.shape_cast %78 : vector<8xf32> to vector<8x1xf32>
    %c2_i32 = arith.constant 2 : i32
    %80 = vector.broadcast %c2_i32 : i32 to vector<8x4xi32>
    %81 = arith.cmpi eq, %41, %80 : vector<8x4xi32>
    %82 = vector.shape_cast %79 : vector<8x1xf32> to vector<8x1xf32>
    %83 = vector.broadcast %82 : vector<8x1xf32> to vector<8x4xf32>
    %84 = arith.select %81, %83, %70 : vector<8x4xi1>, vector<8x4xf32>
    %cst_25 = arith.constant 3.000000e+00 : f32
    %85 = vector.broadcast %cst_25 : f32 to vector<8x128xf32>
    %86 = arith.cmpf oeq, %35, %85 : vector<8x128xf32>
    %87 = arith.andi %28, %86 : vector<8x128xi1>
    %cst_26 = arith.constant 1.000000e+00 : f32
    %88 = vector.broadcast %cst_26 : f32 to vector<8x128xf32>
    %89 = arith.addf %40, %88 : vector<8x128xf32>
    %cst_27 = arith.constant 0.000000e+00 : f32
    %90 = vector.broadcast %cst_27 : f32 to vector<8x128xf32>
    %91 = arith.select %87, %89, %90 : vector<8x128xi1>, vector<8x128xf32>
    %cst_28 = arith.constant dense<0.000000e+00> : vector<8xf32>
    %92 = vector.multi_reduction <add>, %91, %cst_28 [1] : vector<8x128xf32> to vector<8xf32>
    %93 = vector.shape_cast %92 : vector<8xf32> to vector<8x1xf32>
    %c3_i32 = arith.constant 3 : i32
    %94 = vector.broadcast %c3_i32 : i32 to vector<8x4xi32>
    %95 = arith.cmpi eq, %41, %94 : vector<8x4xi32>
    %96 = vector.shape_cast %93 : vector<8x1xf32> to vector<8x1xf32>
    %97 = vector.broadcast %96 : vector<8x1xf32> to vector<8x4xf32>
    %98 = arith.select %95, %97, %84 : vector<8x4xi1>, vector<8x4xf32>
    %cst_29 = arith.constant 0.000000e+00 : f32
    %99 = vector.broadcast %cst_29 : f32 to vector<8x4xf32>
    %100 = arith.cmpf ogt, %98, %99 : vector<8x4xf32>
    %cst_30 = arith.constant 1.000000e+00 : f32
    %101 = vector.broadcast %cst_30 : f32 to vector<8x4xf32>
    %102 = arith.subf %98, %101 : vector<8x4xf32>
    %103 = arith.fptosi %102 : vector<8x4xf32> to vector<8x4xi32>
    %c0_31 = arith.constant 0 : index
    %c0_32 = arith.constant 0 : index
    %c0_33 = arith.constant 0 : index
    %104 = vector.load %arg6[%c0_31, %c0_32, %c0_33] : memref<1x8x4xi32, #tpu.memory_space<vmem>>, vector<1x8x4xi32>
    %105 = vector.shape_cast %104 : vector<1x8x4xi32> to vector<8x4xi32>
    %106 = arith.select %100, %103, %105 : vector<8x4xi1>, vector<8x4xi32>
    %c0_34 = arith.constant 0 : index
    %c0_35 = arith.constant 0 : index
    %c0_36 = arith.constant 0 : index
    %107 = vector.load %arg6[%c0_34, %c0_35, %c0_36] : memref<1x8x4xi32, #tpu.memory_space<vmem>>, vector<1x8x4xi32>
    %108 = vector.shape_cast %107 : vector<1x8x4xi32> to vector<8x4xi32>
    %109 = vector.shape_cast %106 : vector<8x4xi32> to vector<1x8x4xi32>
    tpu.vector_store %arg6[%c0_34, %c0_35, %c0_36], %109 {strides = array<i32>} : memref<1x8x4xi32, #tpu.memory_space<vmem>>, vector<1x8x4xi32>,
    %c0_37 = arith.constant 0 : index
    %c0_38 = arith.constant 0 : index
    %110 = vector.load %arg7[%c0_37, %c0_38] : memref<8x1xf32, #tpu.memory_space<vmem>>, vector<8x1xf32>
    %cst_39 = arith.constant dense<0.000000e+00> : vector<8xf32>
    %111 = vector.multi_reduction <add>, %30, %cst_39 [1] : vector<8x128xf32> to vector<8xf32>
    %112 = vector.shape_cast %111 : vector<8xf32> to vector<8x1xf32>
    %113 = arith.addf %110, %112 : vector<8x1xf32>
    %c0_40 = arith.constant 0 : index
    %c0_41 = arith.constant 0 : index
    %114 = vector.load %arg7[%c0_40, %c0_41] : memref<8x1xf32, #tpu.memory_space<vmem>>, vector<8x1xf32>
    tpu.vector_store %arg7[%c0_40, %c0_41], %113 {strides = array<i32>} : memref<8x1xf32, #tpu.memory_space<vmem>>, vector<8x1xf32>,
    %c0_i32_42 = arith.constant 0 : i32
    %115 = arith.cmpi eq, %arg2, %c0_i32_42 : i32
    %116 = arith.extui %115 : i1 to i32
    %c0_i32_43 = arith.constant 0 : i32
    %117 = arith.cmpi ne, %116, %c0_i32_43 : i32
    scf.if %117 {
      %c0_44 = arith.constant 0 : index
      %c0_45 = arith.constant 0 : index
      %c0_46 = arith.constant 0 : index
      %118 = vector.load %arg6[%c0_44, %c0_45, %c0_46] : memref<1x8x4xi32, #tpu.memory_space<vmem>>, vector<1x8x4xi32>
      %119 = vector.shape_cast %118 : vector<1x8x4xi32> to vector<8x4xi32>
      %120 = vector.extract_strided_slice %119 {offsets = [0, 0], sizes = [8, 1], strides = [1, 1]} : vector<8x4xi32> to vector<8x1xi32>
      %c16_i32 = arith.constant 16 : i32
      %121 = vector.broadcast %c16_i32 : i32 to vector<8x4xi32>
      %122 = arith.cmpi eq, %119, %121 : vector<8x4xi32>
      %123 = vector.shape_cast %120 : vector<8x1xi32> to vector<8x1xi32>
      %124 = vector.broadcast %123 : vector<8x1xi32> to vector<8x4xi32>
      %125 = arith.select %122, %124, %119 : vector<8x4xi1>, vector<8x4xi32>
      %c0_47 = arith.constant 0 : index
      %c0_48 = arith.constant 0 : index
      %c0_49 = arith.constant 0 : index
      %126 = vector.load %arg6[%c0_47, %c0_48, %c0_49] : memref<1x8x4xi32, #tpu.memory_space<vmem>>, vector<1x8x4xi32>
      %127 = vector.shape_cast %126 : vector<1x8x4xi32> to vector<8x4xi32>
      %128 = vector.shape_cast %125 : vector<8x4xi32> to vector<1x8x4xi32>
      tpu.vector_store %arg6[%c0_47, %c0_48, %c0_49], %128 {strides = array<i32>} : memref<1x8x4xi32, #tpu.memory_space<vmem>>, vector<1x8x4xi32>,
    } else {
    }
    return
  }
  func.func @transform_0(%arg0: i32, %arg1: i32, %arg2: i32) -> (i32, i32, i32) {
    %c0_i32 = arith.constant 0 : i32
    %c0_i32_0 = arith.constant 0 : i32
    return %arg0, %arg1, %c0_i32 : i32, i32, i32
  }
  func.func @transform_1(%arg0: i32, %arg1: i32, %arg2: i32) -> (i32, i32, i32) {
    %c0_i32 = arith.constant 0 : i32
    %c0_i32_0 = arith.constant 0 : i32
    return %arg0, %c0_i32, %arg2 : i32, i32, i32
  }
  func.func @transform_2(%arg0: i32, %arg1: i32, %arg2: i32) -> (i32, i32) {
    %c0_i32 = arith.constant 0 : i32
    %c0_i32_0 = arith.constant 0 : i32
    %c0_i32_1 = arith.constant 0 : i32
    return %c0_i32, %c0_i32_0 : i32, i32
  }
  func.func @transform_3(%arg0: i32, %arg1: i32, %arg2: i32) -> (i32, i32, i32) {
    %c0_i32 = arith.constant 0 : i32
    %c0_i32_0 = arith.constant 0 : i32
    return %arg0, %arg1, %c0_i32 : i32, i32, i32
  }
}

</mosaic_0001>

<llo_original>
// kernel: tpu_custom_call.1
$region0: #{tpu_custom_call.1}
  #allocation0 [shape = 'u32[]', space=smem, size = 0x4, offset = 0x4, fixed_abs, tag = 'smem constant byte address 0x4 - core index']
  #allocation1 [shape = 'u32[144,128]{1,0:T(1,128)}', space=vmem, size = 0x12000, scoped, tag = 'internal scratch']
  #allocation2 [shape = 'f32[8,1]{1,0:T(8,128)}', space=vmem, size = 0x1000, scoped, tag = 'scratch operand']
  %s0 = inlined_call_operand.hbm [shape: f32[2,8,8], index: 0, kind: input, shape index: {}]
  %s1 = inlined_call_operand.hbm [shape: f32[2,8,128], index: 1, kind: input, shape index: {}]
  %s2 = inlined_call_operand.hbm [shape: f32[128,128], index: 2, kind: input, shape index: {}]
  %s3 = inlined_call_operand.vmem [shape: s32[2,8,4], index: 3, kind: output, shape index: {}]
  %s4 = sld [smem:[#allocation0]]
  $region65: #{tpu_custom_call.1} parent=0
    _
  %s6 = ssub.s32 1, %s4
  %s7 = scalar_select 0, %s6, %s4
  $region1: #{tpu_custom_call.1} parent=0
    #allocation3 [shape = 'u8[8192]{0}', space=vmem, size = 0x2000, scoped, tag = 'input window, operand 0']
    #allocation4 [shape = 's32[2]{0}', space=sflag, size = 0x8, scoped, tag = 'scoped memory for tpu_custom_call.1']
    #allocation5 [shape = 'u8[8192]{0}', space=vmem, size = 0x2000, scoped, tag = 'input window, operand 1']
    #allocation6 [shape = 's32[2]{0}', space=sflag, size = 0x8, scoped, tag = 'scoped memory for tpu_custom_call.1']
    #allocation7 [shape = 'u8[65536]{0}', space=vmem, size = 0x10000, scoped, tag = 'input window, operand 2, single buffered']
    %8 = vsyncpa [#allocation4], 0
    %s9 = scalar_lea.sflag [#allocation4], 1
    %10 = vsyncpa %s9, 0
    %11 = vsyncpa [#allocation6], 0
    %s12 = scalar_lea.sflag [#allocation6], 1
    %13 = vsyncpa %s12, 0
    loop: start=0, step=1, limit=4
    $region2: #{tpu_custom_call.1} parent=1 // loop_pre_header
      _
    $region3: #{tpu_custom_call.1} parent=1 // loop_header
      %s15 = sphi 0, %s19
      %p16 = scmp.ge.s32.totalorder %s15, 4
      %s22 = sphi 0, %s41
      %s23 = sphi 0, %s37
      %s24 = sphi 0, %s33
      %s25 = sphi 0, %s22
      %s26 = sphi 0, %s23
      %s27 = sphi 0, %s24
      %s28 = sphi 0, %s25
      %s29 = sphi 0, %s26
      %s30 = sphi 0, %s27
      %s46 = sphi 0, %s48
      %s49 = sphi 0, %s46
      %s50 = sphi 0, %s49
      %s66 = sphi 0, %s50
      %s74 = sphi 0, %s76
      %s77 = sphi 0, %s74
      %s78 = sphi 0, %s77
      %s94 = sphi 0, %s78
      %s98 = sphi 0, %s98
      %s100 = sphi 0, %s98
      %s101 = sphi 0, %s100
      %s115 = sphi 0, %s101
      %s123 = sphi 0, %s125
      %s126 = sphi 0, %s123
      %s127 = sphi 0, %s126
      %s143 = sphi 0, %s127
    $region4: #{tpu_custom_call.1} parent=1 // loop_header_branch
      %18 = sbr.rel (%p16) target = $region8
    $region5: #{tpu_custom_call.1} parent=1 // loop_body
      %s20 = ssub.s32 %s15, 1
      %s21 = ssub.s32 %s15, 2
      %s31 = sadd.s32 1, %s24
      %p32 = scmp.ge.s32.totalorder %s31, 1
      %s33 = scalar_select %p32, 0, %s31
      %s34 = sadd.s32 1, %s23
      %s35 = scalar_select %p32, %s34, %s23
      %p36 = scmp.ge.s32.totalorder %s35, 1
      %s37 = scalar_select %p36, 0, %s35
      %s38 = sadd.s32 1, %s22
      %s39 = scalar_select %p36, %s38, %s22
      %p40 = scmp.ge.s32.totalorder %s39, 2
      %s41 = scalar_select %p40, 0, %s39
      %s42 = ssub.s32 %s22, %s41
      %s43 = ssub.s32 %s23, %s37
      %s44 = sor.u32 %s42, %s43
      %p45 = scmp.eq.s32.totalorder %s44, 0
      %s47 = sadd.s32 %s46, 1
      %s48 = scalar_select %p45, %s46, %s47
      %p51 = pneg %p45
      %p52 = scmp.eq.s32.totalorder %s15, 1
      %p53 = por %p51, %p52
      %p54 = scmp.ne.s32.totalorder %s46, %s49
      %p55 = scmp.eq.s32.totalorder %s15, 0
      %p56 = por %p54, %p55
      %p57 = scmp.ne.s32.totalorder %s46, %s49
      %p58 = scmp.eq.s32.totalorder %s20, 1
      %p59 = por %p57, %p58
      %p60 = scmp.ne.s32.totalorder %s49, %s50
      %p61 = scmp.eq.s32.totalorder %s20, 0
      %p62 = por %p60, %p61
      %p63 = scmp.ne.s32.totalorder %s49, %s50
      %p64 = scmp.eq.s32.totalorder %s21, 1
      %p65 = por %p63, %p64
      %p67 = scmp.ne.s32.totalorder %s50, %s66
      %p68 = scmp.eq.s32.totalorder %s21, 0
      %p69 = por %p67, %p68
      %s70 = ssub.s32 %s22, %s41
      %s71 = ssub.s32 %s24, %s33
      %s72 = sor.u32 %s70, %s71
      %p73 = scmp.eq.s32.totalorder %s72, 0
      %s75 = sadd.s32 %s74, 1
      %s76 = scalar_select %p73, %s74, %s75
      %p79 = pneg %p73
      %p80 = scmp.eq.s32.totalorder %s15, 1
      %p81 = por %p79, %p80
      %p82 = scmp.ne.s32.totalorder %s74, %s77
      %p83 = scmp.eq.s32.totalorder %s15, 0
      %p84 = por %p82, %p83
      %p85 = scmp.ne.s32.totalorder %s74, %s77
      %p86 = scmp.eq.s32.totalorder %s20, 1
      %p87 = por %p85, %p86
      %p88 = scmp.ne.s32.totalorder %s77, %s78
      %p89 = scmp.eq.s32.totalorder %s20, 0
      %p90 = por %p88, %p89
      %p91 = scmp.ne.s32.totalorder %s77, %s78
      %p92 = scmp.eq.s32.totalorder %s21, 1
      %p93 = por %p91, %p92
      %p95 = scmp.ne.s32.totalorder %s78, %s94
      %p96 = scmp.eq.s32.totalorder %s21, 0
      %p97 = por %p95, %p96
      %s99 = sadd.s32 %s98, 1
      %p102 = scmp.eq.s32.totalorder %s15, 1
      %p103 = scmp.ne.s32.totalorder %s98, %s100
      %p104 = scmp.eq.s32.totalorder %s15, 0
      %p105 = por %p103, %p104
      %p106 = scmp.ne.s32.totalorder %s98, %s100
      %p107 = scmp.eq.s32.totalorder %s20, 1
      %p108 = por %p106, %p107
      %p109 = scmp.ne.s32.totalorder %s100, %s101
      %p110 = scmp.eq.s32.totalorder %s20, 0
      %p111 = por %p109, %p110
      %p112 = scmp.ne.s32.totalorder %s100, %s101
      %p113 = scmp.eq.s32.totalorder %s21, 1
      %p114 = por %p112, %p113
      %p116 = scmp.ne.s32.totalorder %s101, %s115
      %p117 = scmp.eq.s32.totalorder %s21, 0
      %p118 = por %p116, %p117
      %s119 = ssub.s32 %s22, %s41
      %s120 = ssub.s32 %s23, %s37
      %s121 = sor.u32 %s119, %s120
      %p122 = scmp.eq.s32.totalorder %s121, 0
      %s124 = sadd.s32 %s123, 1
      %s125 = scalar_select %p122, %s123, %s124
      %p128 = pneg %p122
      %p129 = scmp.eq.s32.totalorder %s15, 1
      %p130 = por %p128, %p129
      %p131 = scmp.ne.s32.totalorder %s123, %s126
      %p132 = scmp.eq.s32.totalorder %s15, 0
      %p133 = por %p131, %p132
      %p134 = scmp.ne.s32.totalorder %s123, %s126
      %p135 = scmp.eq.s32.totalorder %s20, 1
      %p136 = por %p134, %p135
      %p137 = scmp.ne.s32.totalorder %s126, %s127
      %p138 = scmp.eq.s32.totalorder %s20, 0
      %p139 = por %p137, %p138
      %p140 = scmp.ne.s32.totalorder %s126, %s127
      %p141 = scmp.eq.s32.totalorder %s21, 1
      %p142 = por %p140, %p141
      %p144 = scmp.ne.s32.totalorder %s127, %s143
      %p145 = scmp.eq.s32.totalorder %s21, 0
      %p146 = por %p144, %p145
      %p147 = scmp.le.s32.totalorder 1, %s15
      %p148 = scmp.lt.s32.totalorder %s15, 3
      %p149 = pnand %p147, %p148
      %p150 = pneg %p149
      // Predicated region
      $region9: #{tpu_custom_call.1} parent=5 // pred_check
        _
      $region10: #{tpu_custom_call.1} parent=5 // pred_check_branch
        %152 = sbr.rel (%p149) target = $region12
      $region11: #{tpu_custom_call.1} parent=5 // pred_region
        %s153 = ssub.s32 %s15, 1
        // Predicated region
        $region13: #{tpu_custom_call.1} parent=11 // pred_check
          %p154 = pneg %p111
        $region14: #{tpu_custom_call.1} parent=11 // pred_check_branch
          %156 = sbr.rel (%p154) target = $region16
        $region15: #{tpu_custom_call.1} parent=11 // pred_region
          %s158 = ssub.s32 2048, 2048
          %159 = vsyncadd [#allocation6], %s158
          %s160 = sshll.u32 [#allocation7], 4
          %s161 = int_to_ptr.vmem [resolvable:$true] %s160
          %166 = dma.hbm_to_vmem [thread:$0]  %s2, 2048, %s161, [#allocation6], 128, 128, 8
        $region16: #{tpu_custom_call.1} parent=11 // pred_fallthru
          _
      $region12: #{tpu_custom_call.1} parent=5 // pred_fallthru
        _
      %p167 = scmp.lt.s32.totalorder %s15, 2
      // Predicated region
      $region17: #{tpu_custom_call.1} parent=5 // pred_check
        %p168 = pneg %p167
      $region18: #{tpu_custom_call.1} parent=5 // pred_check_branch
        %170 = sbr.rel (%p168) target = $region20
      $region19: #{tpu_custom_call.1} parent=5 // pred_region
        // Predicated region
        $region21: #{tpu_custom_call.1} parent=19 // pred_check
          %p171 = pneg %p56
        $region22: #{tpu_custom_call.1} parent=19 // pred_check_branch
          %173 = sbr.rel (%p171) target = $region24
        $region23: #{tpu_custom_call.1} parent=19 // pred_region
          %s174 = sand.u32 %s46, 1
          %s175 = scalar_lea.sflag [#allocation4], %s174
          %s176 = sand.u32 %s46, 1
          %s177 = smul.addr %s176, 8
          %s178 = scalar_lea.vmem [#allocation3], %s177
          %s180 = ssub.s32 128, 128
          %181 = vsyncadd %s175, %s180
          %s182 = sadd.s32 %s23, %s22
          %s183 = smul.addr %s182, 128
          %s184 = scalar_lea.hbm %s0, %s183
          %s186 = sshll.u32 %s178, 4
          %s187 = int_to_ptr.vmem [resolvable:$true] %s186
          %189 = dma.hbm_to_vmem [thread:$0]  %s184, 128, %s187, %s175
        $region24: #{tpu_custom_call.1} parent=19 // pred_fallthru
          _
        // Predicated region
        $region25: #{tpu_custom_call.1} parent=19 // pred_check
          %p190 = pneg %p84
        $region26: #{tpu_custom_call.1} parent=19 // pred_check_branch
          %192 = sbr.rel (%p190) target = $region28
        $region27: #{tpu_custom_call.1} parent=19 // pred_region
          %s193 = sand.u32 %s15, 1
          %s194 = scalar_lea.sflag [#allocation6], %s193
          %s195 = sand.u32 %s74, 1
          %s196 = smul.addr %s195, 8
          %s197 = scalar_lea.vmem [#allocation5], %s196
          %s199 = ssub.s32 128, 128
          %200 = vsyncadd %s194, %s199
          %s201 = sadd.s32 %s24, %s22
          %s202 = smul.addr %s201, 128
          %s203 = scalar_lea.hbm %s1, %s202
          %s205 = sshll.u32 %s197, 4
          %s206 = int_to_ptr.vmem [resolvable:$true] %s205
          %208 = dma.hbm_to_vmem [thread:$0]  %s203, 128, %s206, %s194
        $region28: #{tpu_custom_call.1} parent=19 // pred_fallthru
          _
      $region20: #{tpu_custom_call.1} parent=5 // pred_fallthru
        _
      %p209 = scmp.le.s32.totalorder 1, %s15
      %p210 = scmp.lt.s32.totalorder %s15, 3
      %p211 = pnand %p209, %p210
      %p212 = pneg %p211
      // Predicated region
      $region29: #{tpu_custom_call.1} parent=5 // pred_check
        _
      $region30: #{tpu_custom_call.1} parent=5 // pred_check_branch
        %214 = sbr.rel (%p211) target = $region32
      $region31: #{tpu_custom_call.1} parent=5 // pred_region
        %s215 = ssub.s32 %s15, 1
        %s216 = sand.u32 %s49, 1
        %s217 = scalar_lea.sflag [#allocation4], %s216
        %s218 = sand.u32 %s49, 1
        %s219 = smul.addr %s218, 8
        %s220 = scalar_lea.vmem [#allocation3], %s219
        // Predicated region
        $region33: #{tpu_custom_call.1} parent=31 // pred_check
          %p221 = pneg %p62
        $region34: #{tpu_custom_call.1} parent=31 // pred_check_branch
          %223 = sbr.rel (%p221) target = $region36
        $region35: #{tpu_custom_call.1} parent=31 // pred_region
          %224 = dma.done %s217, 128
        $region36: #{tpu_custom_call.1} parent=31 // pred_fallthru
          _
        %s225 = sand.u32 %s20, 1
        %s226 = scalar_lea.sflag [#allocation6], %s225
        %s227 = sand.u32 %s77, 1
        %s228 = smul.addr %s227, 8
        %s229 = scalar_lea.vmem [#allocation5], %s228
        // Predicated region
        $region37: #{tpu_custom_call.1} parent=31 // pred_check
          %p230 = pneg %p90
        $region38: #{tpu_custom_call.1} parent=31 // pred_check_branch
          %232 = sbr.rel (%p230) target = $region40
        $region39: #{tpu_custom_call.1} parent=31 // pred_region
          %233 = dma.done %s226, 128
        $region40: #{tpu_custom_call.1} parent=31 // pred_fallthru
          _
        // Predicated region
        $region41: #{tpu_custom_call.1} parent=31 // pred_check
          %p234 = pneg %p111
        $region42: #{tpu_custom_call.1} parent=31 // pred_check_branch
          %236 = sbr.rel (%p234) target = $region44
        $region43: #{tpu_custom_call.1} parent=31 // pred_region
          %237 = dma.done [#allocation6], 2048
        $region44: #{tpu_custom_call.1} parent=31 // pred_fallthru
          _
        %s238 = sand.u32 %s49, 1
        %s239 = scalar_lea.sflag [#allocation4], %s238
        %s240 = sand.u32 %s49, 1
        %s241 = smul.addr %s240, 8
        %s242 = scalar_lea.vmem [#allocation3], %s241
        %p243 = pneg %p62
        %p244 = pneg %p59
        %s245 = sand.u32 %s20, 1
        %s246 = scalar_lea.sflag [#allocation6], %s245
        %s247 = sand.u32 %s77, 1
        %s248 = smul.addr %s247, 8
        %s249 = scalar_lea.vmem [#allocation5], %s248
        %p250 = pneg %p90
        %p251 = pneg %p87
        %p252 = pneg %p111
        %p253 = pneg %p108
        %p254 = pneg %p139
        %p255 = pneg %p136
        %p256 = scmp.lt.s32.totalorder %s25, 1
        %s257 = scalar_select %p256, %s25, 1
        %p258 = scmp.lt.s32.totalorder %s26, 0
        %s259 = scalar_select %p258, %s26, 0
        %s260 = sadd.s32 %s259, %s257
        %s261 = smul.addr %s260, 8
        %s262 = scalar_lea.vmem %s3, %s261
        %p263 = scmp.lt.s32.totalorder %s25, 1
        %s264 = scalar_select %p263, %s25, 1
        %p265 = scmp.lt.s32.totalorder %s26, 0
        %s266 = scalar_select %p265, %s26, 0
        %s267 = sadd.s32 %s266, %s264
        %s268 = smul.addr %s267, 8
        %s269 = scalar_lea.vmem %s3, %s268
        %p270 = scmp.eq.s32.totalorder %s27, 0
        // Predicated region
        $region45: #{tpu_custom_call.1} parent=31 // pred_check
          %p271 = pneg %p270
        $region46: #{tpu_custom_call.1} parent=31 // pred_check_branch
          %273 = sbr.rel (%p271) target = $region48
        $region47: #{tpu_custom_call.1} parent=31 // pred_region
          %vm274 = vcmask 31744
          %275 = vst.msk [vmem:[%s269] sm:$0xff] %vm274, 16
          %vm276 = vcmask 7168
          %277 = vst.msk [vmem:[#allocation2] sm:$0xff] %vm276, 0.0
        $region48: #{tpu_custom_call.1} parent=31 // pred_fallthru
          _
        %v278 = vld [vmem:[%s220] sm:$0xff]
        %v279 = vld [vmem:[%s229] sm:$0xff]
        %281 = vset.pattern.permute.xlu0 0
        %282 = vperm.xlu0 %281, %v278
        %v283 = vpop.permute.xlu0 %282
        %v285 = vlaneseq
        %v286 = vshrl.u32 %v285, 7
        %v287 = vsub.s32 0, %v286
        %v288 = vrot.slane %v279, %v287
        %v289 = vsub.f32 %v283, %v288
        %v290 = vmul.f32 %v289, %v289
        %291 = vset.pattern.permute.xlu0 1
        %292 = vperm.xlu0 %291, %v278
        %v293 = vpop.permute.xlu0 %292
        %v295 = vlaneseq
        %v296 = vshrl.u32 %v295, 7
        %v297 = vsub.s32 1, %v296
        %v298 = vrot.slane %v279, %v297
        %v299 = vsub.f32 %v293, %v298
        %v300 = vmul.f32 %v299, %v299
        %v301 = vadd.f32 %v290, %v300
        %302 = vset.pattern.permute.xlu0 2
        %303 = vperm.xlu0 %302, %v278
        %v304 = vpop.permute.xlu0 %303
        %v306 = vlaneseq
        %v307 = vshrl.u32 %v306, 7
        %v308 = vsub.s32 2, %v307
        %v309 = vrot.slane %v279, %v308
        %v310 = vsub.f32 %v304, %v309
        %v311 = vmul.f32 %v310, %v310
        %v312 = vadd.f32 %v301, %v311
        %vm313 = vcmp.le.f32.partialorder %v312, 0.16
        %v314 = vsel %vm313, 1, 0
        %v315 = vcvt.s32.f32 %v314
        %v316 = vld [vmem:[#allocation7] sm:$0xff]
        %v317 = vld [vmem:[#allocation7 + $0x8] sm:$0xff]
        %v318 = vld [vmem:[#allocation7 + $0x10] sm:$0xff]
        %v319 = vld [vmem:[#allocation7 + $0x18] sm:$0xff]
        %v320 = vld [vmem:[#allocation7 + $0x20] sm:$0xff]
        %v321 = vld [vmem:[#allocation7 + $0x28] sm:$0xff]
        %v322 = vld [vmem:[#allocation7 + $0x30] sm:$0xff]
        %v323 = vld [vmem:[#allocation7 + $0x38] sm:$0xff]
        %v324 = vld [vmem:[#allocation7 + $0x40] sm:$0xff]
        %v325 = vld [vmem:[#allocation7 + $0x48] sm:$0xff]
        %v326 = vld [vmem:[#allocation7 + $0x50] sm:$0xff]
        %v327 = vld [vmem:[#allocation7 + $0x58] sm:$0xff]
        %v328 = vld [vmem:[#allocation7 + $0x60] sm:$0xff]
        %v329 = vld [vmem:[#allocation7 + $0x68] sm:$0xff]
        %v330 = vld [vmem:[#allocation7 + $0x70] sm:$0xff]
        %v331 = vld [vmem:[#allocation7 + $0x78] sm:$0xff]
        %332 = vmatprep.subr.mxu0 0.0
        %333 = vmatpush1.msra.mxu0 %v316
        %334 = vmatprep.subr.mxu0 0.0
        %335 = vmatpush1.msra.mxu0 %v317
        %336 = vmatprep.subr.mxu0 0.0
        %337 = vmatpush1.msra.mxu0 %v318
        %338 = vmatprep.subr.mxu0 0.0
        %339 = vmatpush1.msra.mxu0 %v319
        %340 = vmatprep.subr.mxu0 0.0
        %341 = vmatpush1.msra.mxu0 %v320
        %342 = vmatprep.subr.mxu0 0.0
        %343 = vmatpush1.msra.mxu0 %v321
        %344 = vmatprep.subr.mxu0 0.0
        %345 = vmatpush1.msra.mxu0 %v322
        %346 = vmatprep.subr.mxu0 0.0
        %347 = vmatpush1.msra.mxu0 %v323
        %348 = vmatprep.subr.mxu0 0.0
        %349 = vmatpush1.msra.mxu0 %v324
        %350 = vmatprep.subr.mxu0 0.0
        %351 = vmatpush1.msra.mxu0 %v325
        %352 = vmatprep.subr.mxu0 0.0
        %353 = vmatpush1.msra.mxu0 %v326
        %354 = vmatprep.subr.mxu0 0.0
        %355 = vmatpush1.msra.mxu0 %v327
        %356 = vmatprep.subr.mxu0 0.0
        %357 = vmatpush1.msra.mxu0 %v328
        %358 = vmatprep.subr.mxu0 0.0
        %359 = vmatpush1.msra.mxu0 %v329
        %360 = vmatprep.subr.mxu0 0.0
        %361 = vmatpush1.msra.mxu0 %v330
        %362 = vmatprep.subr.mxu0 0.0
        %363 = vmatpush1.msra.mxu0 %v331
        %364 = vmatprep.subr.mxu0 0.0
        %365 = vmatpush1.msra.mxu0 0.0
        %366 = vmatprep.subr.mxu0 0.0
        %367 = vmatpush1.msra.mxu0 0.0
        %368 = vmatprep.subr.mxu0 0.0
        %369 = vmatpush1.msra.mxu0 0.0
        %370 = vmatprep.subr.mxu0 0.0
        %371 = vmatpush1.msra.mxu0 0.0
        %372 = vmatprep.subr.mxu0 0.0
        %373 = vmatpush1.msra.mxu0 0.0
        %374 = vmatprep.subr.mxu0 0.0
        %375 = vmatpush1.msra.mxu0 0.0
        %376 = vmatprep.subr.mxu0 0.0
        %377 = vmatpush1.msra.mxu0 0.0
        %378 = vmatprep.subr.mxu0 0.0
        %379 = vmatpush1.msra.mxu0 0.0
        %380 = vmatprep.subr.mxu0 0.0
        %381 = vmatpush1.msra.mxu0 0.0
        %382 = vmatprep.subr.mxu0 0.0
        %383 = vmatpush1.msra.mxu0 0.0
        %384 = vmatprep.subr.mxu0 0.0
        %385 = vmatpush1.msra.mxu0 0.0
        %386 = vmatprep.subr.mxu0 0.0
        %387 = vmatpush1.msra.mxu0 0.0
        %388 = vmatprep.subr.mxu0 0.0
        %389 = vmatpush1.msra.mxu0 0.0
        %390 = vmatprep.subr.mxu0 0.0
        %391 = vmatpush1.msra.mxu0 0.0
        %392 = vmatprep.subr.mxu0 0.0
        %393 = vmatpush1.msra.mxu0 0.0
        %394 = vmatprep.subr.mxu0 0.0
        %395 = vmatpush1.msra.mxu0 0.0
        %396 = vmatprep.mubr.f32.mxu0 0.0
        %397 = vmatmul.mubr.f32.gmra.mrb[0].mxu0 %v315
        %v398 = vpop.f32.mrb[0].mxu0
        %v399 = vadd.f32 0.0, %v398
        %v400 = vpop.f32.mrb[0].mxu0
        %401 = vdwg.mxu0
        %v402 = vld [vmem:[#allocation2] sm:$0xff]
        %404 = vset.pattern.permute.xlu0 0
        %405 = vperm.xlu0 %404, %v402
        %v406 = vpop.permute.xlu0 %405
        %v408 = vadd.f32 %v406, %v399
        %s409 = smul.u32 %s27, 128
        %v410 = vlaneseq
        %v411 = vand.u32 %v410, 127
        %v412 = vstv %s409
        %v413 = vadd.s32 %v412, %v411
        %v414 = vcvt.s32.f32 %v413
        %vm415 = vcmp.eq.f32.partialorder %v408, 0.0
        %vm416 = vmand %vm313, %vm415
        %v417 = vadd.f32 %v414, 1.0
        %v418 = vsel %vm416, %v417, 0.0
        %419 = vadd.xlane.f32.xlu0 %v418
        %v420 = vpop.xlane.xlu0 %419
        %vm421 = vcmp.eq.s32.totalorder %v411, 0
        %v422 = vsel %vm421, %v420, 0.0
        %vm423 = vcmp.eq.f32.partialorder %v408, 1.0
        %vm424 = vmand %vm313, %vm423
        %v425 = vsel %vm424, %v417, 0.0
        %426 = vadd.xlane.f32.xlu0 %v425
        %v427 = vpop.xlane.xlu0 %426
        %vm428 = vcmp.eq.s32.totalorder %v411, 1
        %v429 = vsel %vm428, %v427, %v422
        %vm430 = vcmp.eq.f32.partialorder %v408, 2.0
        %vm431 = vmand %vm313, %vm430
        %v432 = vsel %vm431, %v417, 0.0
        %433 = vadd.xlane.f32.xlu0 %v432
        %v434 = vpop.xlane.xlu0 %433
        %vm435 = vcmp.eq.s32.totalorder %v411, 2
        %v436 = vsel %vm435, %v434, %v429
        %vm437 = vcmp.eq.f32.partialorder %v408, 3.0
        %vm438 = vmand %vm313, %vm437
        %v439 = vsel %vm438, %v417, 0.0
        %440 = vadd.xlane.f32.xlu0 %v439
        %v441 = vpop.xlane.xlu0 %440
        %vm442 = vcmp.eq.s32.totalorder %v411, 3
        %v443 = vsel %vm442, %v441, %v436
        %vm444 = vcmp.gt.f32.partialorder %v443, 0.0
        %v445 = vsub.f32 %v443, 1.0
        %v446 = vcvt.f32.s32.to.zero.pseudo %v445
        %v447 = vld [vmem:[%s269] sm:$0xff]
        %v448 = vsel %vm444, %v446, %v447
        %vm449 = vcmask 31744
        %450 = vst.msk [vmem:[%s269] sm:$0xff] %vm449, %v448
        %v451 = vld [vmem:[#allocation2] sm:$0xff]
        %452 = vadd.xlane.f32.xlu0 %v315
        %v453 = vpop.xlane.xlu0 %452
        %v454 = vadd.f32 %v451, %v453
        %vm455 = vcmask 7168
        %456 = vst.msk [vmem:[#allocation2] sm:$0xff] %vm455, %v454
        // Predicated region
        $region49: #{tpu_custom_call.1} parent=31 // pred_check
          %p457 = pneg %p270
        $region50: #{tpu_custom_call.1} parent=31 // pred_check_branch
          %459 = sbr.rel (%p457) target = $region52
        $region51: #{tpu_custom_call.1} parent=31 // pred_region
          %v460 = vld [vmem:[%s269] sm:$0xff]
          %vm461 = vcmp.eq.s32.totalorder %v460, 16
          %462 = vset.pattern.permute.xlu0 0
          %463 = vperm.xlu0 %462, %v460
          %v464 = vpop.permute.xlu0 %463
          %v465 = vsel %vm461, %v464, %v460
          %466 = vst.msk [vmem:[%s269] sm:$0xff] %vm449, %v465
        $region52: #{tpu_custom_call.1} parent=31 // pred_fallthru
          _
        %p467 = scmp.lt.s32.totalorder %s25, 1
        %s468 = scalar_select %p467, %s25, 1
        %p469 = scmp.lt.s32.totalorder %s26, 0
        %s470 = scalar_select %p469, %s26, 0
        %s471 = sadd.s32 %s470, %s468
        %s472 = smul.addr %s471, 8
        %s473 = scalar_lea.vmem %s3, %s472
        // Predicated region
        $region53: #{tpu_custom_call.1} parent=31 // pred_check
          %p474 = pneg %p136
        $region54: #{tpu_custom_call.1} parent=31 // pred_check_branch
          %476 = sbr.rel (%p474) target = $region56
        $region55: #{tpu_custom_call.1} parent=31 // pred_region
          _
        $region56: #{tpu_custom_call.1} parent=31 // pred_fallthru
          _
      $region32: #{tpu_custom_call.1} parent=5 // pred_fallthru
        _
      %p477 = scmp.le.s32.totalorder 2, %s15
      // Predicated region
      $region57: #{tpu_custom_call.1} parent=5 // pred_check
        %p478 = pneg %p477
      $region58: #{tpu_custom_call.1} parent=5 // pred_check_branch
        %480 = sbr.rel (%p478) target = $region60
      $region59: #{tpu_custom_call.1} parent=5 // pred_region
        %s481 = ssub.s32 %s15, 2
        // Predicated region
        $region61: #{tpu_custom_call.1} parent=59 // pred_check
          %p482 = pneg %p142
        $region62: #{tpu_custom_call.1} parent=59 // pred_check_branch
          %484 = sbr.rel (%p482) target = $region64
        $region63: #{tpu_custom_call.1} parent=59 // pred_region
          %p485 = scmp.lt.s32.totalorder %s28, 1
          %s486 = scalar_select %p485, %s28, 1
          %p487 = scmp.lt.s32.totalorder %s29, 0
          %s488 = scalar_select %p487, %s29, 0
          %s489 = sadd.s32 %s488, %s486
          %s490 = smul.addr %s489, 8
          %s491 = scalar_lea.vmem %s3, %s490
        $region64: #{tpu_custom_call.1} parent=59 // pred_fallthru
          _
      $region60: #{tpu_custom_call.1} parent=5 // pred_fallthru
        _
    $region6: #{tpu_custom_call.1} parent=1 // loop_footer
      %s19 = sadd.s32 1, %s15
    $region7: #{tpu_custom_call.1} parent=1 // loop_footer_branch
      %14 = sbr.rel target = $region3
    $region8: #{tpu_custom_call.1} parent=1 // loop_exit
      _
    %492 = vsyncpa [#allocation4], 1
    %s493 = scalar_lea.sflag [#allocation4], 1
    %494 = vsyncpa %s493, 1
    %495 = vsyncpa [#allocation6], 1
    %s496 = scalar_lea.sflag [#allocation6], 1
    %497 = vsyncpa %s496, 1

</llo_original>
